<compile_context>
chip_gen: v5e
topology: v5e:2x2
jax: 0.10.0
libtpu: 0.0.40
codegen_flags: <defaults>
</compile_context>

<pallas_src>
import functools

import jax
import jax.numpy as jnp
from jax import lax
from jax.experimental import pallas as pl
from jax.experimental.pallas import tpu as pltpu


def _round_up(x, m):
    return ((x + m - 1) // m) * m


def _cdiv(a, b):
    return (a + b - 1) // b


def _encoder_kernel(x_ref, w_ref, b_ref, o_ref, *, f_total, tk, w_resident):
    """One (tm, l_pad) output tile, accumulated in place over the F grid axis.

    x_ref : (tm, tk)        input dtype  flattened-image tile (F on the lane axis)
    w_ref : (f_pad, l_pad)  bf16         resident transposed weight   (w_resident)
            (tk, l_pad)     bf16         streamed weight k-tile       (otherwise)
    b_ref : (1, l_pad)      f32          bias
    o_ref : (tm, l_pad)     f32          output tile, resident across the k axis
    """
    k = pl.program_id(1)

    @pl.when(k == 0)
    def _():
        o_ref[...] = jnp.zeros_like(o_ref)

    x_tile = x_ref[...]
    if f_total % tk != 0:
        # Static F remainder: zero the out-of-bounds lanes of the edge k tile so
        # undefined OOB reads cannot contaminate the reduction.
        col = k * tk + lax.broadcasted_iota(jnp.int32, x_tile.shape, 1)
        x_tile = jnp.where(col < f_total, x_tile, jnp.zeros_like(x_tile))
    x_bf = x_tile.astype(jnp.bfloat16)          # in-VMEM cast (VPU), no host copy

    if w_resident:
        off = pl.multiple_of(k * tk, tk)
        w_tile = w_ref[pl.ds(off, tk), :]       # slice the resident weight
    else:
        w_tile = w_ref[...]

    # Canonical (m,k)x(k,n) MXU matmul; f32 accumulation directly into o_ref.
    o_ref[...] += jnp.dot(x_bf, w_tile, preferred_element_type=jnp.float32)

    @pl.when(k == pl.num_programs(1) - 1)
    def _():
        o_ref[...] += b_ref[...]


def base_image_encoder_forward(x_nchw, weight, bias, *, tm=256, tk=2048):
    """x_nchw: (N, C, H, W); weight: (latent_dim, F) PyTorch-style; bias: (latent_dim,).

    Returns (N, latent_dim) f32 == x.view(N, -1) @ weight.T + bias, computed with
    bf16 operands and f32 accumulation on the MXU.
    """
    n = int(x_nchw.shape[0])
    f = int(x_nchw.shape[1] * x_nchw.shape[2] * x_nchw.shape[3])
    latent_dim = int(weight.shape[0])

    l_pad = _round_up(max(latent_dim, 128), 128)           # lane-dense output dim

    # --- reduction (F) tiling: big tiles amortize the ~0.35 us per-step cost ----
    tk_eff = min(tk, _round_up(f, 128))
    f_pad = _round_up(f, tk_eff)
    grid_k = f_pad // tk_eff

    # --- batch (N) tiling: balanced tiles, no near-2x batch padding -------------
    num_m = _cdiv(n, tm)
    if n >= 16:
        num_m = max(num_m, 2)            # keep the 2nd TensorCore busy on v7x
    tm_eff = _round_up(_cdiv(n, num_m), 8)
    grid_m = _cdiv(n, tm_eff)

    # --- host-side layout plumbing (x reshape is free; no materializing cast) ---
    x_flat = x_nchw.reshape(n, f)                          # == torch .view(n, -1)
    x_bytes = x_flat.dtype.itemsize
    # Static-parameter prep (one-time cost; cache/hoist it out of the step in a
    # real training loop): pad + transpose weight to (F_pad, L_pad) bf16.
    w_p = jnp.pad(weight.astype(jnp.bfloat16),
                  ((0, l_pad - latent_dim), (0, f_pad - f))).T
    b_p = jnp.pad(bias.astype(jnp.float32), (0, l_pad - latent_dim)).reshape(1, l_pad)

    # --- VMEM working set / weight-residency decision ----------------------------
    x_buf = 2 * tm_eff * tk_eff * x_bytes                  # double-buffered input
    o_buf = 2 * tm_eff * l_pad * 4                         # double-buffered output
    b_buf = 2 * 8 * l_pad * 4                              # bias (sublane-padded)
    w_res_buf = 2 * f_pad * l_pad * 2                      # resident (count 2 bufs)
    w_str_buf = 2 * tk_eff * l_pad * 2                     # streamed per-k tile
    w_resident = (x_buf + o_buf + b_buf + w_res_buf) <= 24 * 1024 * 1024
    w_buf = w_res_buf if w_resident else w_str_buf
    vmem_limit = max(int((x_buf + o_buf + b_buf + w_buf) * 1.5), 4 * 1024 * 1024)

    if w_resident:
        # DMA'd from HBM exactly once; never re-streamed per batch tile.
        w_spec = pl.BlockSpec((f_pad, l_pad), lambda i, k: (0, 0))
    else:
        w_spec = pl.BlockSpec((tk_eff, l_pad), lambda i, k: (k, 0))

    kernel = functools.partial(_encoder_kernel, f_total=f, tk=tk_eff,
                               w_resident=w_resident)

    w_hbm_reads = 1 if w_resident else grid_m
    cost = pl.CostEstimate(
        flops=2 * grid_m * tm_eff * f_pad * l_pad,
        transcendentals=0,
        bytes_accessed=(n * f * x_bytes
                        + w_hbm_reads * f_pad * l_pad * 2
                        + n * l_pad * 4
                        + l_pad * 4),
    )

    out_p = pl.pallas_call(
        kernel,
        out_shape=jax.ShapeDtypeStruct((n, l_pad), jnp.float32),
        grid=(grid_m, grid_k),
        in_specs=[
            pl.BlockSpec((tm_eff, tk_eff), lambda i, k: (i, k)),   # x tile
            w_spec,                                                # weight
            pl.BlockSpec((1, l_pad), lambda i, k: (0, 0)),         # bias
        ],
        out_specs=pl.BlockSpec((tm_eff, l_pad), lambda i, k: (i, 0)),
        compiler_params=pltpu.CompilerParams(
            dimension_semantics=("parallel", "arbitrary"),
            vmem_limit_bytes=vmem_limit,
        ),
        cost_estimate=cost,
    )(x_flat, w_p, b_p)

    return out_p[:, :latent_dim]


def init_params(key, latent_dim, num_channels, image_size):
    """Deterministic params mirroring _init_layer for nn.Linear:
       kaiming_normal_ (fan_in mode, gain=sqrt(2)) weight, zero bias."""
    f = num_channels * image_size * image_size
    std = (2.0 / f) ** 0.5
    w = jax.random.normal(key, (latent_dim, f), dtype=jnp.float32) * std
    b = jnp.zeros((latent_dim,), dtype=jnp.float32)
    return w, b


if __name__ == "__main__":
    latent_dim = 32
    num_channels = 4
    image_size = 16
    batch = 2

    key = jax.random.PRNGKey(0)
    kx, kw = jax.random.split(key)

    x = jax.random.normal(kx, (batch, num_channels, image_size, image_size),
                          dtype=jnp.float32)
    weight, bias = init_params(kw, latent_dim, num_channels, image_size)

    out = base_image_encoder_forward(x, weight, bias)
    out = jax.block_until_ready(out)

    # Reference with the same bf16-operand / f32-accumulate numerics.
    ref = jnp.dot(x.reshape(batch, -1).astype(jnp.bfloat16),
                  weight.astype(jnp.bfloat16).T,
                  preferred_element_type=jnp.float32) + bias
    # Full-precision reference (loose tolerance: bf16 operand rounding).
    ref_f32 = x.reshape(batch, -1) @ weight.T + bias

    assert out.shape == (batch, latent_dim)
    assert jnp.allclose(out, ref, atol=2e-3, rtol=2e-3)
    assert jnp.allclose(out, ref_f32, atol=5e-2, rtol=5e-2)

    print("KERNEL_OK")
</pallas_src>

<mosaic_0001>
module attributes {stable_mosaic.version = 11 : i64} {
  func.func @_encoder_kernel(%arg0: i32, %arg1: i32, %arg2: memref<8x1024xf32, #tpu.memory_space<vmem>>, %arg3: memref<1024x128xbf16, #tpu.memory_space<vmem>>, %arg4: memref<1x128xf32, #tpu.memory_space<vmem>>, %arg5: memref<8x128xf32, #tpu.memory_space<vmem>>) attributes {dimension_semantics = [#tpu.dimension_semantics<parallel>, #tpu.dimension_semantics<arbitrary>], iteration_bounds = array<i64: 1, 1>, scalar_prefetch = 0 : i64, scratch_operands = 0 : i64, tpu.core_type = #tpu.core_type<tc>, window_params = [{transform_indices = @transform_0, window_bounds = array<i64: 8, 1024>}, {pipeline_mode = #tpu.pipeline_mode<synchronous>, transform_indices = @transform_1, window_bounds = array<i64: 1024, 128>}, {pipeline_mode = #tpu.pipeline_mode<synchronous>, transform_indices = @transform_2, window_bounds = array<i64: 1, 128>}, {transform_indices = @transform_3, window_bounds = array<i64: 8, 128>}]} {
    %c0_i32 = arith.constant 0 : i32
    %0 = arith.cmpi eq, %arg1, %c0_i32 : i32
    %1 = arith.extui %0 : i1 to i32
    %c0_i32_0 = arith.constant 0 : i32
    %2 = arith.cmpi ne, %1, %c0_i32_0 : i32
    scf.if %2 {
      %cst_9 = arith.constant 0.000000e+00 : f32
      %16 = vector.broadcast %cst_9 : f32 to vector<8x128xf32>
      %c0_10 = arith.constant 0 : index
      %c0_11 = arith.constant 0 : index
      %17 = vector.load %arg5[%c0_10, %c0_11] : memref<8x128xf32, #tpu.memory_space<vmem>>, vector<8x128xf32>
      tpu.vector_store %arg5[%c0_10, %c0_11], %16 {strides = array<i32>} : memref<8x128xf32, #tpu.memory_space<vmem>>, vector<8x128xf32>,
    } else {
    }
    %c0 = arith.constant 0 : index
    %c0_1 = arith.constant 0 : index
    %3 = vector.load %arg2[%c0, %c0_1] : memref<8x1024xf32, #tpu.memory_space<vmem>>, vector<8x1024xf32>
    %4 = arith.truncf %3 : vector<8x1024xf32> to vector<8x1024xbf16>
    %c1024_i32 = arith.constant 1024 : i32
    %5 = arith.muli %arg1, %c1024_i32 : i32
    %6 = tpu.assume_multiple %5, 1024 : i32
    %7 = arith.index_cast %6 : i32 to index
    %c0_2 = arith.constant 0 : index
    %8 = vector.load %arg3[%7, %c0_2] : memref<1024x128xbf16, #tpu.memory_space<vmem>>, vector<1024x128xbf16>
    %c0_3 = arith.constant 0 : index
    %c0_4 = arith.constant 0 : index
    %9 = vector.load %arg5[%c0_3, %c0_4] : memref<8x128xf32, #tpu.memory_space<vmem>>, vector<8x128xf32>
    %cst = arith.constant dense<0.000000e+00> : vector<8x128xf32>
    %10 = tpu.matmul %4, %8, %cst {dimension_numbers = #tpu.dot_dimension_numbers<[1], [0], [0], [1], [0, 0, 1, 1], [], []>} : vector<8x1024xbf16>, vector<1024x128xbf16>, vector<8x128xf32> -> vector<8x128xf32>
    %11 = arith.addf %9, %10 : vector<8x128xf32>
    %c0_5 = arith.constant 0 : index
    %c0_6 = arith.constant 0 : index
    %12 = vector.load %arg5[%c0_5, %c0_6] : memref<8x128xf32, #tpu.memory_space<vmem>>, vector<8x128xf32>
    tpu.vector_store %arg5[%c0_5, %c0_6], %11 {strides = array<i32>} : memref<8x128xf32, #tpu.memory_space<vmem>>, vector<8x128xf32>,
    %c0_i32_7 = arith.constant 0 : i32
    %13 = arith.cmpi eq, %arg1, %c0_i32_7 : i32
    %14 = arith.extui %13 : i1 to i32
    %c0_i32_8 = arith.constant 0 : i32
    %15 = arith.cmpi ne, %14, %c0_i32_8 : i32
    scf.if %15 {
      %c0_9 = arith.constant 0 : index
      %c0_10 = arith.constant 0 : index
      %16 = vector.load %arg5[%c0_9, %c0_10] : memref<8x128xf32, #tpu.memory_space<vmem>>, vector<8x128xf32>
      %c0_11 = arith.constant 0 : index
      %c0_12 = arith.constant 0 : index
      %17 = vector.load %arg4[%c0_11, %c0_12] : memref<1x128xf32, #tpu.memory_space<vmem>>, vector<1x128xf32>
      %18 = vector.broadcast %17 : vector<1x128xf32> to vector<8x128xf32>
      %19 = arith.addf %16, %18 : vector<8x128xf32>
      %c0_13 = arith.constant 0 : index
      %c0_14 = arith.constant 0 : index
      %20 = vector.load %arg5[%c0_13, %c0_14] : memref<8x128xf32, #tpu.memory_space<vmem>>, vector<8x128xf32>
      tpu.vector_store %arg5[%c0_13, %c0_14], %19 {strides = array<i32>} : memref<8x128xf32, #tpu.memory_space<vmem>>, vector<8x128xf32>,
    } else {
    }
    return
  }
  func.func @transform_0(%arg0: i32, %arg1: i32) -> (i32, i32) {
    %c0_i32 = arith.constant 0 : i32
    return %arg0, %arg1 : i32, i32
  }
  func.func @transform_1(%arg0: i32, %arg1: i32) -> (i32, i32) {
    %c0_i32 = arith.constant 0 : i32
    %c0_i32_0 = arith.constant 0 : i32
    %c0_i32_1 = arith.constant 0 : i32
    return %c0_i32, %c0_i32_0 : i32, i32
  }
  func.func @transform_2(%arg0: i32, %arg1: i32) -> (i32, i32) {
    %c0_i32 = arith.constant 0 : i32
    %c0_i32_0 = arith.constant 0 : i32
    %c0_i32_1 = arith.constant 0 : i32
    return %c0_i32, %c0_i32_0 : i32, i32
  }
  func.func @transform_3(%arg0: i32, %arg1: i32) -> (i32, i32) {
    %c0_i32 = arith.constant 0 : i32
    %c0_i32_0 = arith.constant 0 : i32
    return %arg0, %c0_i32 : i32, i32
  }
}

</mosaic_0001>

<llo_original>
// kernel: tpu_custom_call.1
$region0: #{tpu_custom_call.1}
  #allocation0 [shape = 'u32[]', space=smem, size = 0x4, offset = 0x4, fixed_abs, tag = 'smem constant byte address 0x4 - core index']
  #allocation1 [shape = 'u32[72,128]{1,0:T(1,128)}', space=vmem, size = 0x9000, scoped, tag = 'internal scratch']
  %s0 = inlined_call_operand.hbm [shape: f32[2,1024], index: 0, kind: input, shape index: {}]
  %s1 = inlined_call_operand.hbm [shape: bf16[1024,128], index: 1, kind: input, shape index: {}]
  %s2 = inlined_call_operand.vmem [shape: f32[1,128], index: 2, kind: input, shape index: {}]
  %s3 = inlined_call_operand.hbm [shape: f32[2,128], index: 3, kind: output, shape index: {}]
  %s4 = sld [smem:[#allocation0]]
  $region38: #{tpu_custom_call.1} parent=0
    _
  %s6 = ssub.s32 1, %s4
  %s7 = scalar_select 0, %s6, %s4
  $region1: #{tpu_custom_call.1} parent=0
    #allocation2 [shape = 'u8[32768]{0}', space=vmem, size = 0x8000, scoped, tag = 'input window, operand 0, single buffered']
    #allocation3 [shape = 's32[1]{0}', space=sflag, size = 0x4, scoped, tag = 'scoped memory for tpu_custom_call.1']
    #allocation4 [shape = 's32[1]{0}', space=sflag, size = 0x4, scoped, tag = 'scoped memory for tpu_custom_call.1']
    #allocation5 [shape = 'u8[262144]{0}', space=vmem, size = 0x40000, scoped, tag = 'input window, operand 1, single buffered']
    #allocation6 [shape = 's32[1]{0}', space=sflag, size = 0x4, scoped, tag = 'scoped memory for tpu_custom_call.1']
    #allocation7 [shape = 'u8[4096]{0}', space=vmem, size = 0x1000, scoped, tag = 'output window, operand 0, single buffered']
    %8 = vsyncpa [#allocation3], 0
    %9 = vsyncpa [#allocation6], 0
    %10 = vsyncpa [#allocation4], 0
    // Predicated region
    $region2: #{tpu_custom_call.1} parent=1 // pred_check
      _
    $region3: #{tpu_custom_call.1} parent=1 // pred_check_branch
      %12 = sbr.rel (0) target = $region5
    $region4: #{tpu_custom_call.1} parent=1 // pred_region
      %14 = vsyncadd [#allocation3], 768
      %s15 = sshll.u32 %s0, 4
      %s16 = int_to_ptr.hbm [resolvable:$true] %s15
      %s17 = sshll.u32 [#allocation2], 4
      %s18 = int_to_ptr.vmem [resolvable:$true] %s17
      %23 = dma.hbm_to_vmem [thread:$0]  %s16, 256, %s18, [#allocation3], 256, 256, 16
    $region5: #{tpu_custom_call.1} parent=1 // pred_fallthru
      _
    // Predicated region
    $region6: #{tpu_custom_call.1} parent=1 // pred_check
      _
    $region7: #{tpu_custom_call.1} parent=1 // pred_check_branch
      %25 = sbr.rel (0) target = $region9
    $region8: #{tpu_custom_call.1} parent=1 // pred_region
      %27 = vsyncadd [#allocation6], 0
      %s28 = sshll.u32 %s1, 4
      %s29 = int_to_ptr.hbm [resolvable:$true] %s28
      %s30 = sshll.u32 [#allocation5], 4
      %s31 = int_to_ptr.vmem [resolvable:$true] %s30
      %36 = dma.hbm_to_vmem [thread:$0]  %s29, 8192, %s31, [#allocation6], 64, 64, 4
    $region9: #{tpu_custom_call.1} parent=1 // pred_fallthru
      _
    // Predicated region
    $region10: #{tpu_custom_call.1} parent=1 // pred_check
      _
    $region11: #{tpu_custom_call.1} parent=1 // pred_check_branch
      %38 = sbr.rel (0) target = $region13
    $region12: #{tpu_custom_call.1} parent=1 // pred_region
      _
    $region13: #{tpu_custom_call.1} parent=1 // pred_fallthru
      _
    // Predicated region
    $region14: #{tpu_custom_call.1} parent=1 // pred_check
      _
    $region15: #{tpu_custom_call.1} parent=1 // pred_check_branch
      %40 = sbr.rel (0) target = $region17
    $region16: #{tpu_custom_call.1} parent=1 // pred_region
      %42 = dma.done [#allocation3], 1024
    $region17: #{tpu_custom_call.1} parent=1 // pred_fallthru
      _
    // Predicated region
    $region18: #{tpu_custom_call.1} parent=1 // pred_check
      _
    $region19: #{tpu_custom_call.1} parent=1 // pred_check_branch
      %44 = sbr.rel (0) target = $region21
    $region20: #{tpu_custom_call.1} parent=1 // pred_region
      %46 = dma.done [#allocation6], 8192
    $region21: #{tpu_custom_call.1} parent=1 // pred_fallthru
      _
    %p47 = scmp.eq.s32.totalorder 0, 0
    // Predicated region
    $region22: #{tpu_custom_call.1} parent=1 // pred_check
      %p48 = pneg %p47
    $region23: #{tpu_custom_call.1} parent=1 // pred_check_branch
      %50 = sbr.rel (%p48) target = $region25
    $region24: #{tpu_custom_call.1} parent=1 // pred_region
      %51 = vst [vmem:[#allocation7] sm:$0xff] 0.0
    $region25: #{tpu_custom_call.1} parent=1 // pred_fallthru
      _
    %v52 = vld [vmem:[#allocation2] sm:$0xff]
    %v53 = vld [vmem:[#allocation2 + $0x8] sm:$0xff]
    %v54 = vld [vmem:[#allocation2 + $0x10] sm:$0xff]
    %v55 = vld [vmem:[#allocation2 + $0x18] sm:$0xff]
    %v56 = vld [vmem:[#allocation2 + $0x20] sm:$0xff]
    %v57 = vld [vmem:[#allocation2 + $0x28] sm:$0xff]
    %v58 = vld [vmem:[#allocation2 + $0x30] sm:$0xff]
    %v59 = vld [vmem:[#allocation2 + $0x38] sm:$0xff]
    %68 = vst [vmem:[#allocation1] ss:$4 sm:$0xff] %v52
    %s69 = scalar_lea.vmem [#allocation1], 1
    %70 = vst [vmem:[%s69] ss:$4 sm:$0xff] %v54
    %s71 = scalar_lea.vmem [#allocation1], 2
    %72 = vst [vmem:[%s71] ss:$4 sm:$0xff] %v56
    %s73 = scalar_lea.vmem [#allocation1], 3
    %74 = vst [vmem:[%s73] ss:$4 sm:$0xff] %v58
    %s75 = scalar_lea.vmem [#allocation1], 32
    %76 = vst [vmem:[%s75] ss:$4 sm:$0xff] %v53
    %s77 = scalar_lea.vmem [#allocation1], 33
    %78 = vst [vmem:[%s77] ss:$4 sm:$0xff] %v55
    %s79 = scalar_lea.vmem [#allocation1], 34
    %80 = vst [vmem:[%s79] ss:$4 sm:$0xff] %v57
    %s81 = scalar_lea.vmem [#allocation1], 35
    %82 = vst [vmem:[%s81] ss:$4 sm:$0xff] %v59
    %v83 = vld.sshfl [vmem:[#allocation1] sm:$0xff pattern:$0x73625140]
    %v84 = vld.sshfl [vmem:[#allocation1 + $0x8] sm:$0xff pattern:$0x73625140]
    %v85 = vld.sshfl [vmem:[#allocation1 + $0x10] sm:$0xff pattern:$0x73625140]
    %v86 = vld.sshfl [vmem:[#allocation1 + $0x18] sm:$0xff pattern:$0x73625140]
    %v87 = vld.sshfl [vmem:[#allocation1 + $0x20] sm:$0xff pattern:$0x73625140]
    %v88 = vld.sshfl [vmem:[#allocation1 + $0x28] sm:$0xff pattern:$0x73625140]
    %v89 = vld.sshfl [vmem:[#allocation1 + $0x30] sm:$0xff pattern:$0x73625140]
    %v90 = vld.sshfl [vmem:[#allocation1 + $0x38] sm:$0xff pattern:$0x73625140]
    %v99 = vpack.c.bf16 %v83, %v83
    %v100 = vpack.c.bf16 %v84, %v84
    %v101 = vpack.c.bf16 %v85, %v85
    %v102 = vpack.c.bf16 %v86, %v86
    %v103 = vpack.c.bf16 %v87, %v87
    %v104 = vpack.c.bf16 %v88, %v88
    %v105 = vpack.c.bf16 %v89, %v89
    %v106 = vpack.c.bf16 %v90, %v90
    %s107 = smul.u32 0, 1024
    %s108 = sshra.s32 %s107, 3
    %s109 = sand.u32 %s107, 7
    %s110 = smul.addr %s108, 4
    %s111 = scalar_lea.vmem [#allocation5], %s110
    %v112 = vld [vmem:[%s111] sm:$0xf]
    %v113 = vld [vmem:[%s111 + $0x4] sm:$0xf]
    %v114 = vld [vmem:[%s111 + $0x8] sm:$0xf]
    %v115 = vld [vmem:[%s111 + $0xc] sm:$0xf]
    %v116 = vld [vmem:[%s111 + $0x10] sm:$0xf]
    %v117 = vld [vmem:[%s111 + $0x14] sm:$0xf]
    %v118 = vld [vmem:[%s111 + $0x18] sm:$0xf]
    %v119 = vld [vmem:[%s111 + $0x1c] sm:$0xf]
    %v120 = vld [vmem:[%s111 + $0x20] sm:$0xf]
    %v121 = vld [vmem:[%s111 + $0x24] sm:$0xf]
    %v122 = vld [vmem:[%s111 + $0x28] sm:$0xf]
    %v123 = vld [vmem:[%s111 + $0x2c] sm:$0xf]
    %v124 = vld [vmem:[%s111 + $0x30] sm:$0xf]
    %v125 = vld [vmem:[%s111 + $0x34] sm:$0xf]
    %v126 = vld [vmem:[%s111 + $0x38] sm:$0xf]
    %v127 = vld [vmem:[%s111 + $0x3c] sm:$0xf]
    %v128 = vld [vmem:[%s111 + $0x40] sm:$0xf]
    %v129 = vld [vmem:[%s111 + $0x44] sm:$0xf]
    %v130 = vld [vmem:[%s111 + $0x48] sm:$0xf]
    %v131 = vld [vmem:[%s111 + $0x4c] sm:$0xf]
    %v132 = vld [vmem:[%s111 + $0x50] sm:$0xf]
    %v133 = vld [vmem:[%s111 + $0x54] sm:$0xf]
    %v134 = vld [vmem:[%s111 + $0x58] sm:$0xf]
    %v135 = vld [vmem:[%s111 + $0x5c] sm:$0xf]
    %v136 = vld [vmem:[%s111 + $0x60] sm:$0xf]
    %v137 = vld [vmem:[%s111 + $0x64] sm:$0xf]
    %v138 = vld [vmem:[%s111 + $0x68] sm:$0xf]
    %v139 = vld [vmem:[%s111 + $0x6c] sm:$0xf]
    %v140 = vld [vmem:[%s111 + $0x70] sm:$0xf]
    %v141 = vld [vmem:[%s111 + $0x74] sm:$0xf]
    %v142 = vld [vmem:[%s111 + $0x78] sm:$0xf]
    %v143 = vld [vmem:[%s111 + $0x7c] sm:$0xf]
    %v144 = vld [vmem:[%s111 + $0x80] sm:$0xf]
    %v145 = vld [vmem:[%s111 + $0x84] sm:$0xf]
    %v146 = vld [vmem:[%s111 + $0x88] sm:$0xf]
    %v147 = vld [vmem:[%s111 + $0x8c] sm:$0xf]
    %v148 = vld [vmem:[%s111 + $0x90] sm:$0xf]
    %v149 = vld [vmem:[%s111 + $0x94] sm:$0xf]
    %v150 = vld [vmem:[%s111 + $0x98] sm:$0xf]
    %v151 = vld [vmem:[%s111 + $0x9c] sm:$0xf]
    %v152 = vld [vmem:[%s111 + $0xa0] sm:$0xf]
    %v153 = vld [vmem:[%s111 + $0xa4] sm:$0xf]
    %v154 = vld [vmem:[%s111 + $0xa8] sm:$0xf]
    %v155 = vld [vmem:[%s111 + $0xac] sm:$0xf]
    %v156 = vld [vmem:[%s111 + $0xb0] sm:$0xf]
    %v157 = vld [vmem:[%s111 + $0xb4] sm:$0xf]
    %v158 = vld [vmem:[%s111 + $0xb8] sm:$0xf]
    %v159 = vld [vmem:[%s111 + $0xbc] sm:$0xf]
    %v160 = vld [vmem:[%s111 + $0xc0] sm:$0xf]
    %v161 = vld [vmem:[%s111 + $0xc4] sm:$0xf]
    %v162 = vld [vmem:[%s111 + $0xc8] sm:$0xf]
    %v163 = vld [vmem:[%s111 + $0xcc] sm:$0xf]
    %v164 = vld [vmem:[%s111 + $0xd0] sm:$0xf]
    %v165 = vld [vmem:[%s111 + $0xd4] sm:$0xf]
    %v166 = vld [vmem:[%s111 + $0xd8] sm:$0xf]
    %v167 = vld [vmem:[%s111 + $0xdc] sm:$0xf]
    %v168 = vld [vmem:[%s111 + $0xe0] sm:$0xf]
    %v169 = vld [vmem:[%s111 + $0xe4] sm:$0xf]
    %v170 = vld [vmem:[%s111 + $0xe8] sm:$0xf]
    %v171 = vld [vmem:[%s111 + $0xec] sm:$0xf]
    %v172 = vld [vmem:[%s111 + $0xf0] sm:$0xf]
    %v173 = vld [vmem:[%s111 + $0xf4] sm:$0xf]
    %v174 = vld [vmem:[%s111 + $0xf8] sm:$0xf]
    %v175 = vld [vmem:[%s111 + $0xfc] sm:$0xf]
    %v176 = vld [vmem:[%s111 + $0x100] sm:$0xf]
    %v177 = vld [vmem:[%s111 + $0x104] sm:$0xf]
    %v178 = vld [vmem:[%s111 + $0x108] sm:$0xf]
    %v179 = vld [vmem:[%s111 + $0x10c] sm:$0xf]
    %v180 = vld [vmem:[%s111 + $0x110] sm:$0xf]
    %v181 = vld [vmem:[%s111 + $0x114] sm:$0xf]
    %v182 = vld [vmem:[%s111 + $0x118] sm:$0xf]
    %v183 = vld [vmem:[%s111 + $0x11c] sm:$0xf]
    %v184 = vld [vmem:[%s111 + $0x120] sm:$0xf]
    %v185 = vld [vmem:[%s111 + $0x124] sm:$0xf]
    %v186 = vld [vmem:[%s111 + $0x128] sm:$0xf]
    %v187 = vld [vmem:[%s111 + $0x12c] sm:$0xf]
    %v188 = vld [vmem:[%s111 + $0x130] sm:$0xf]
    %v189 = vld [vmem:[%s111 + $0x134] sm:$0xf]
    %v190 = vld [vmem:[%s111 + $0x138] sm:$0xf]
    %v191 = vld [vmem:[%s111 + $0x13c] sm:$0xf]
    %v192 = vld [vmem:[%s111 + $0x140] sm:$0xf]
    %v193 = vld [vmem:[%s111 + $0x144] sm:$0xf]
    %v194 = vld [vmem:[%s111 + $0x148] sm:$0xf]
    %v195 = vld [vmem:[%s111 + $0x14c] sm:$0xf]
    %v196 = vld [vmem:[%s111 + $0x150] sm:$0xf]
    %v197 = vld [vmem:[%s111 + $0x154] sm:$0xf]
    %v198 = vld [vmem:[%s111 + $0x158] sm:$0xf]
    %v199 = vld [vmem:[%s111 + $0x15c] sm:$0xf]
    %v200 = vld [vmem:[%s111 + $0x160] sm:$0xf]
    %v201 = vld [vmem:[%s111 + $0x164] sm:$0xf]
    %v202 = vld [vmem:[%s111 + $0x168] sm:$0xf]
    %v203 = vld [vmem:[%s111 + $0x16c] sm:$0xf]
    %v204 = vld [vmem:[%s111 + $0x170] sm:$0xf]
    %v205 = vld [vmem:[%s111 + $0x174] sm:$0xf]
    %v206 = vld [vmem:[%s111 + $0x178] sm:$0xf]
    %v207 = vld [vmem:[%s111 + $0x17c] sm:$0xf]
    %v208 = vld [vmem:[%s111 + $0x180] sm:$0xf]
    %v209 = vld [vmem:[%s111 + $0x184] sm:$0xf]
    %v210 = vld [vmem:[%s111 + $0x188] sm:$0xf]
    %v211 = vld [vmem:[%s111 + $0x18c] sm:$0xf]
    %v212 = vld [vmem:[%s111 + $0x190] sm:$0xf]
    %v213 = vld [vmem:[%s111 + $0x194] sm:$0xf]
    %v214 = vld [vmem:[%s111 + $0x198] sm:$0xf]
    %v215 = vld [vmem:[%s111 + $0x19c] sm:$0xf]
    %v216 = vld [vmem:[%s111 + $0x1a0] sm:$0xf]
    %v217 = vld [vmem:[%s111 + $0x1a4] sm:$0xf]
    %v218 = vld [vmem:[%s111 + $0x1a8] sm:$0xf]
    %v219 = vld [vmem:[%s111 + $0x1ac] sm:$0xf]
    %v220 = vld [vmem:[%s111 + $0x1b0] sm:$0xf]
    %v221 = vld [vmem:[%s111 + $0x1b4] sm:$0xf]
    %v222 = vld [vmem:[%s111 + $0x1b8] sm:$0xf]
    %v223 = vld [vmem:[%s111 + $0x1bc] sm:$0xf]
    %v224 = vld [vmem:[%s111 + $0x1c0] sm:$0xf]
    %v225 = vld [vmem:[%s111 + $0x1c4] sm:$0xf]
    %v226 = vld [vmem:[%s111 + $0x1c8] sm:$0xf]
    %v227 = vld [vmem:[%s111 + $0x1cc] sm:$0xf]
    %v228 = vld [vmem:[%s111 + $0x1d0] sm:$0xf]
    %v229 = vld [vmem:[%s111 + $0x1d4] sm:$0xf]
    %v230 = vld [vmem:[%s111 + $0x1d8] sm:$0xf]
    %v231 = vld [vmem:[%s111 + $0x1dc] sm:$0xf]
    %v232 = vld [vmem:[%s111 + $0x1e0] sm:$0xf]
    %v233 = vld [vmem:[%s111 + $0x1e4] sm:$0xf]
    %v234 = vld [vmem:[%s111 + $0x1e8] sm:$0xf]
    %v235 = vld [vmem:[%s111 + $0x1ec] sm:$0xf]
    %v236 = vld [vmem:[%s111 + $0x1f0] sm:$0xf]
    %v237 = vld [vmem:[%s111 + $0x1f4] sm:$0xf]
    %v238 = vld [vmem:[%s111 + $0x1f8] sm:$0xf]
    %v239 = vld [vmem:[%s111 + $0x1fc] sm:$0xf]
    %v240 = vld [vmem:[#allocation7] sm:$0xff]
    %v369 = vunpack.c.l.b16 %v112
    %v370 = vunpack.c.l.b16 %v113
    %v371 = vunpack.c.l.b16 %v114
    %v372 = vunpack.c.l.b16 %v115
    %v373 = vunpack.c.l.b16 %v116
    %v374 = vunpack.c.l.b16 %v117
    %v375 = vunpack.c.l.b16 %v118
    %v376 = vunpack.c.l.b16 %v119
    %v377 = vunpack.c.l.b16 %v120
    %v378 = vunpack.c.l.b16 %v121
    %v379 = vunpack.c.l.b16 %v122
    %v380 = vunpack.c.l.b16 %v123
    %v381 = vunpack.c.l.b16 %v124
    %v382 = vunpack.c.l.b16 %v125
    %v383 = vunpack.c.l.b16 %v126
    %v384 = vunpack.c.l.b16 %v127
    %v385 = vunpack.c.l.b16 %v128
    %v386 = vunpack.c.l.b16 %v129
    %v387 = vunpack.c.l.b16 %v130
    %v388 = vunpack.c.l.b16 %v131
    %v389 = vunpack.c.l.b16 %v132
    %v390 = vunpack.c.l.b16 %v133
    %v391 = vunpack.c.l.b16 %v134
    %v392 = vunpack.c.l.b16 %v135
    %v393 = vunpack.c.l.b16 %v136
    %v394 = vunpack.c.l.b16 %v137
    %v395 = vunpack.c.l.b16 %v138
    %v396 = vunpack.c.l.b16 %v139
    %v397 = vunpack.c.l.b16 %v140
    %v398 = vunpack.c.l.b16 %v141
    %v399 = vunpack.c.l.b16 %v142
    %v400 = vunpack.c.l.b16 %v143
    %v401 = vunpack.c.l.b16 %v144
    %v402 = vunpack.c.l.b16 %v145
    %v403 = vunpack.c.l.b16 %v146
    %v404 = vunpack.c.l.b16 %v147
    %v405 = vunpack.c.l.b16 %v148
    %v406 = vunpack.c.l.b16 %v149
    %v407 = vunpack.c.l.b16 %v150
    %v408 = vunpack.c.l.b16 %v151
    %v409 = vunpack.c.l.b16 %v152
    %v410 = vunpack.c.l.b16 %v153
    %v411 = vunpack.c.l.b16 %v154
    %v412 = vunpack.c.l.b16 %v155
    %v413 = vunpack.c.l.b16 %v156
    %v414 = vunpack.c.l.b16 %v157
    %v415 = vunpack.c.l.b16 %v158
    %v416 = vunpack.c.l.b16 %v159
    %v417 = vunpack.c.l.b16 %v160
    %v418 = vunpack.c.l.b16 %v161
    %v419 = vunpack.c.l.b16 %v162
    %v420 = vunpack.c.l.b16 %v163
    %v421 = vunpack.c.l.b16 %v164
    %v422 = vunpack.c.l.b16 %v165
    %v423 = vunpack.c.l.b16 %v166
    %v424 = vunpack.c.l.b16 %v167
    %v425 = vunpack.c.l.b16 %v168
    %v426 = vunpack.c.l.b16 %v169
    %v427 = vunpack.c.l.b16 %v170
    %v428 = vunpack.c.l.b16 %v171
    %v429 = vunpack.c.l.b16 %v172
    %v430 = vunpack.c.l.b16 %v173
    %v431 = vunpack.c.l.b16 %v174
    %v432 = vunpack.c.l.b16 %v175
    %v433 = vunpack.c.l.b16 %v176
    %v434 = vunpack.c.l.b16 %v177
    %v435 = vunpack.c.l.b16 %v178
    %v436 = vunpack.c.l.b16 %v179
    %v437 = vunpack.c.l.b16 %v180
    %v438 = vunpack.c.l.b16 %v181
    %v439 = vunpack.c.l.b16 %v182
    %v440 = vunpack.c.l.b16 %v183
    %v441 = vunpack.c.l.b16 %v184
    %v442 = vunpack.c.l.b16 %v185
    %v443 = vunpack.c.l.b16 %v186
    %v444 = vunpack.c.l.b16 %v187
    %v445 = vunpack.c.l.b16 %v188
    %v446 = vunpack.c.l.b16 %v189
    %v447 = vunpack.c.l.b16 %v190
    %v448 = vunpack.c.l.b16 %v191
    %v449 = vunpack.c.l.b16 %v192
    %v450 = vunpack.c.l.b16 %v193
    %v451 = vunpack.c.l.b16 %v194
    %v452 = vunpack.c.l.b16 %v195
    %v453 = vunpack.c.l.b16 %v196
    %v454 = vunpack.c.l.b16 %v197
    %v455 = vunpack.c.l.b16 %v198
    %v456 = vunpack.c.l.b16 %v199
    %v457 = vunpack.c.l.b16 %v200
    %v458 = vunpack.c.l.b16 %v201
    %v459 = vunpack.c.l.b16 %v202
    %v460 = vunpack.c.l.b16 %v203
    %v461 = vunpack.c.l.b16 %v204
    %v462 = vunpack.c.l.b16 %v205
    %v463 = vunpack.c.l.b16 %v206
    %v464 = vunpack.c.l.b16 %v207
    %v465 = vunpack.c.l.b16 %v208
    %v466 = vunpack.c.l.b16 %v209
    %v467 = vunpack.c.l.b16 %v210
    %v468 = vunpack.c.l.b16 %v211
    %v469 = vunpack.c.l.b16 %v212
    %v470 = vunpack.c.l.b16 %v213
    %v471 = vunpack.c.l.b16 %v214
    %v472 = vunpack.c.l.b16 %v215
    %v473 = vunpack.c.l.b16 %v216
    %v474 = vunpack.c.l.b16 %v217
    %v475 = vunpack.c.l.b16 %v218
    %v476 = vunpack.c.l.b16 %v219
    %v477 = vunpack.c.l.b16 %v220
    %v478 = vunpack.c.l.b16 %v221
    %v479 = vunpack.c.l.b16 %v222
    %v480 = vunpack.c.l.b16 %v223
    %v481 = vunpack.c.l.b16 %v224
    %v482 = vunpack.c.l.b16 %v225
    %v483 = vunpack.c.l.b16 %v226
    %v484 = vunpack.c.l.b16 %v227
    %v485 = vunpack.c.l.b16 %v228
    %v486 = vunpack.c.l.b16 %v229
    %v487 = vunpack.c.l.b16 %v230
    %v488 = vunpack.c.l.b16 %v231
    %v489 = vunpack.c.l.b16 %v232
    %v490 = vunpack.c.l.b16 %v233
    %v491 = vunpack.c.l.b16 %v234
    %v492 = vunpack.c.l.b16 %v235
    %v493 = vunpack.c.l.b16 %v236
    %v494 = vunpack.c.l.b16 %v237
    %v495 = vunpack.c.l.b16 %v238
    %v496 = vunpack.c.l.b16 %v239
    %v497 = vpack.c.b16 %v370, %v369
    %v498 = vpack.c.b16 %v372, %v371
    %v499 = vpack.c.b16 %v374, %v373
    %v500 = vpack.c.b16 %v376, %v375
    %v501 = vpack.c.b16 %v378, %v377
    %v502 = vpack.c.b16 %v380, %v379
    %v503 = vpack.c.b16 %v382, %v381
    %v504 = vpack.c.b16 %v384, %v383
    %v505 = vpack.c.b16 %v386, %v385
    %v506 = vpack.c.b16 %v388, %v387
    %v507 = vpack.c.b16 %v390, %v389
    %v508 = vpack.c.b16 %v392, %v391
    %v509 = vpack.c.b16 %v394, %v393
    %v510 = vpack.c.b16 %v396, %v395
    %v511 = vpack.c.b16 %v398, %v397
    %v512 = vpack.c.b16 %v400, %v399
    %v513 = vpack.c.b16 %v402, %v401
    %v514 = vpack.c.b16 %v404, %v403
    %v515 = vpack.c.b16 %v406, %v405
    %v516 = vpack.c.b16 %v408, %v407
    %v517 = vpack.c.b16 %v410, %v409
    %v518 = vpack.c.b16 %v412, %v411
    %v519 = vpack.c.b16 %v414, %v413
    %v520 = vpack.c.b16 %v416, %v415
    %v521 = vpack.c.b16 %v418, %v417
    %v522 = vpack.c.b16 %v420, %v419
    %v523 = vpack.c.b16 %v422, %v421
    %v524 = vpack.c.b16 %v424, %v423
    %v525 = vpack.c.b16 %v426, %v425
    %v526 = vpack.c.b16 %v428, %v427
    %v527 = vpack.c.b16 %v430, %v429
    %v528 = vpack.c.b16 %v432, %v431
    %v529 = vpack.c.b16 %v434, %v433
    %v530 = vpack.c.b16 %v436, %v435
    %v531 = vpack.c.b16 %v438, %v437
    %v532 = vpack.c.b16 %v440, %v439
    %v533 = vpack.c.b16 %v442, %v441
    %v534 = vpack.c.b16 %v444, %v443
    %v535 = vpack.c.b16 %v446, %v445
    %v536 = vpack.c.b16 %v448, %v447
    %v537 = vpack.c.b16 %v450, %v449
    %v538 = vpack.c.b16 %v452, %v451
    %v539 = vpack.c.b16 %v454, %v453
    %v540 = vpack.c.b16 %v456, %v455
    %v541 = vpack.c.b16 %v458, %v457
    %v542 = vpack.c.b16 %v460, %v459
    %v543 = vpack.c.b16 %v462, %v461
    %v544 = vpack.c.b16 %v464, %v463
    %v545 = vpack.c.b16 %v466, %v465
    %v546 = vpack.c.b16 %v468, %v467
    %v547 = vpack.c.b16 %v470, %v469
    %v548 = vpack.c.b16 %v472, %v471
    %v549 = vpack.c.b16 %v474, %v473
    %v550 = vpack.c.b16 %v476, %v475
    %v551 = vpack.c.b16 %v478, %v477
    %v552 = vpack.c.b16 %v480, %v479
    %v553 = vpack.c.b16 %v482, %v481
    %v554 = vpack.c.b16 %v484, %v483
    %v555 = vpack.c.b16 %v486, %v485
    %v556 = vpack.c.b16 %v488, %v487
    %v557 = vpack.c.b16 %v490, %v489
    %v558 = vpack.c.b16 %v492, %v491
    %v559 = vpack.c.b16 %v494, %v493
    %v560 = vpack.c.b16 %v496, %v495
    %625 = vmatpush.bf16.msra.mxu0 %v504
    %626 = vmatpush.bf16.msra.mxu0 %v503
    %627 = vmatpush.bf16.msra.mxu0 %v502
    %628 = vmatpush.bf16.msra.mxu0 %v501
    %629 = vmatpush.bf16.msra.mxu0 %v500
    %630 = vmatpush.bf16.msra.mxu0 %v499
    %631 = vmatpush.bf16.msra.mxu0 %v498
    %632 = vmatpush.bf16.msra.mxu0 %v497
    %633 = vmatmul.bf16.gmra.mxu0 %v99
    %v634 = vpop.f32.mrf.mxu0
    %v635 = vadd.f32 0.0, %v634
    %v636 = vpop.f32.mrf.mxu0
    %637 = vdwg.mxu0
    %638 = vmatpush.bf16.msra.mxu0 %v512
    %639 = vmatpush.bf16.msra.mxu0 %v511
    %640 = vmatpush.bf16.msra.mxu0 %v510
    %641 = vmatpush.bf16.msra.mxu0 %v509
    %642 = vmatpush.bf16.msra.mxu0 %v508
    %643 = vmatpush.bf16.msra.mxu0 %v507
    %644 = vmatpush.bf16.msra.mxu0 %v506
    %645 = vmatpush.bf16.msra.mxu0 %v505
    %646 = vmatmul.bf16.gmra.mxu0 %v100
    %v647 = vpop.f32.mrf.mxu0
    %v648 = vadd.f32 %v635, %v647
    %v649 = vpop.f32.mrf.mxu0
    %650 = vdwg.mxu0
    %651 = vmatpush.bf16.msra.mxu0 %v520
    %652 = vmatpush.bf16.msra.mxu0 %v519
    %653 = vmatpush.bf16.msra.mxu0 %v518
    %654 = vmatpush.bf16.msra.mxu0 %v517
    %655 = vmatpush.bf16.msra.mxu0 %v516
    %656 = vmatpush.bf16.msra.mxu0 %v515
    %657 = vmatpush.bf16.msra.mxu0 %v514
    %658 = vmatpush.bf16.msra.mxu0 %v513
    %659 = vmatmul.bf16.gmra.mxu0 %v101
    %v660 = vpop.f32.mrf.mxu0
    %v661 = vadd.f32 %v648, %v660
    %v662 = vpop.f32.mrf.mxu0
    %663 = vdwg.mxu0
    %664 = vmatpush.bf16.msra.mxu0 %v528
    %665 = vmatpush.bf16.msra.mxu0 %v527
    %666 = vmatpush.bf16.msra.mxu0 %v526
    %667 = vmatpush.bf16.msra.mxu0 %v525
    %668 = vmatpush.bf16.msra.mxu0 %v524
    %669 = vmatpush.bf16.msra.mxu0 %v523
    %670 = vmatpush.bf16.msra.mxu0 %v522
    %671 = vmatpush.bf16.msra.mxu0 %v521
    %672 = vmatmul.bf16.gmra.mxu0 %v102
    %v673 = vpop.f32.mrf.mxu0
    %v674 = vadd.f32 %v661, %v673
    %v675 = vpop.f32.mrf.mxu0
    %676 = vdwg.mxu0
    %677 = vmatpush.bf16.msra.mxu0 %v536
    %678 = vmatpush.bf16.msra.mxu0 %v535
    %679 = vmatpush.bf16.msra.mxu0 %v534
    %680 = vmatpush.bf16.msra.mxu0 %v533
    %681 = vmatpush.bf16.msra.mxu0 %v532
    %682 = vmatpush.bf16.msra.mxu0 %v531
    %683 = vmatpush.bf16.msra.mxu0 %v530
    %684 = vmatpush.bf16.msra.mxu0 %v529
    %685 = vmatmul.bf16.gmra.mxu0 %v103
    %v686 = vpop.f32.mrf.mxu0
    %v687 = vadd.f32 %v674, %v686
    %v688 = vpop.f32.mrf.mxu0
    %689 = vdwg.mxu0
    %690 = vmatpush.bf16.msra.mxu0 %v544
    %691 = vmatpush.bf16.msra.mxu0 %v543
    %692 = vmatpush.bf16.msra.mxu0 %v542
    %693 = vmatpush.bf16.msra.mxu0 %v541
    %694 = vmatpush.bf16.msra.mxu0 %v540
    %695 = vmatpush.bf16.msra.mxu0 %v539
    %696 = vmatpush.bf16.msra.mxu0 %v538
    %697 = vmatpush.bf16.msra.mxu0 %v537
    %698 = vmatmul.bf16.gmra.mxu0 %v104
    %v699 = vpop.f32.mrf.mxu0
    %v700 = vadd.f32 %v687, %v699
    %v701 = vpop.f32.mrf.mxu0
    %702 = vdwg.mxu0
    %703 = vmatpush.bf16.msra.mxu0 %v552
    %704 = vmatpush.bf16.msra.mxu0 %v551
    %705 = vmatpush.bf16.msra.mxu0 %v550
    %706 = vmatpush.bf16.msra.mxu0 %v549
    %707 = vmatpush.bf16.msra.mxu0 %v548
    %708 = vmatpush.bf16.msra.mxu0 %v547
    %709 = vmatpush.bf16.msra.mxu0 %v546
    %710 = vmatpush.bf16.msra.mxu0 %v545
    %711 = vmatmul.bf16.gmra.mxu0 %v105
    %v712 = vpop.f32.mrf.mxu0
    %v713 = vadd.f32 %v700, %v712
    %v714 = vpop.f32.mrf.mxu0
    %715 = vdwg.mxu0
    %716 = vmatpush.bf16.msra.mxu0 %v560
    %717 = vmatpush.bf16.msra.mxu0 %v559
    %718 = vmatpush.bf16.msra.mxu0 %v558
    %719 = vmatpush.bf16.msra.mxu0 %v557
    %720 = vmatpush.bf16.msra.mxu0 %v556
    %721 = vmatpush.bf16.msra.mxu0 %v555
    %722 = vmatpush.bf16.msra.mxu0 %v554
    %723 = vmatpush.bf16.msra.mxu0 %v553
    %724 = vmatmul.bf16.gmra.mxu0 %v106
    %v725 = vpop.f32.mrf.mxu0
    %v726 = vadd.f32 %v713, %v725
    %v727 = vpop.f32.mrf.mxu0
    %728 = vdwg.mxu0
    %v729 = vadd.f32 %v240, %v726
    %730 = vst [vmem:[#allocation7] sm:$0xff] %v729
    // Predicated region
    $region26: #{tpu_custom_call.1} parent=1 // pred_check
      %p731 = pneg %p47
    $region27: #{tpu_custom_call.1} parent=1 // pred_check_branch
      %733 = sbr.rel (%p731) target = $region29
    $region28: #{tpu_custom_call.1} parent=1 // pred_region
      %v734 = vld [vmem:[#allocation7] sm:$0xff]
      %v735 = vld [vmem:[%s2] sm:$0x1]
      %v737 = vperm.slane %v735, 0
      %v739 = vadd.f32 %v734, %v737
      %740 = vst [vmem:[#allocation7] sm:$0xff] %v739
    $region29: #{tpu_custom_call.1} parent=1 // pred_fallthru
      _
    // Predicated region
    $region30: #{tpu_custom_call.1} parent=1 // pred_check
      _
    $region31: #{tpu_custom_call.1} parent=1 // pred_check_branch
      %742 = sbr.rel (0) target = $region33
    $region32: #{tpu_custom_call.1} parent=1 // pred_region
      %744 = vsyncadd [#allocation4], 96
      %s745 = sshll.u32 [#allocation7], 4
      %s746 = int_to_ptr.vmem [resolvable:$true] %s745
      %s747 = sshll.u32 %s3, 4
      %s748 = int_to_ptr.hbm [resolvable:$true] %s747
      %753 = dma.vmem_to_hbm [thread:$0]  %s746, 32, %s748, [#allocation4], 32, 32, 2
    $region33: #{tpu_custom_call.1} parent=1 // pred_fallthru
      _
    // Predicated region
    $region34: #{tpu_custom_call.1} parent=1 // pred_check
      _
    $region35: #{tpu_custom_call.1} parent=1 // pred_check_branch
      %755 = sbr.rel (0) target = $region37
    $region36: #{tpu_custom_call.1} parent=1 // pred_region
      %757 = dma.done [#allocation4], 128
    $region37: #{tpu_custom_call.1} parent=1 // pred_fallthru
      _
    %758 = vsyncpa [#allocation3], 1
    %759 = vsyncpa [#allocation6], 1
    %760 = vsyncpa [#allocation4], 1

</llo_original>
